<compile_context>
chip_gen: v6e
topology: v6e:2x2x1
jax: 0.10.0
libtpu: 0.0.40
codegen_flags: <defaults>
</compile_context>

<pallas_src>
import jax
import jax.numpy as jnp
from jax.experimental import pallas as pl
from jax.experimental.pallas import tpu as pltpu


LANES = 128
MAX_ROW_TILE = 1024  # 1024x128 f32 = 512 KiB per double-buffered input buffer


def _make_l1_kernel(rows_total, row_tile, n_tiles, inv_n):
    """Build an L1-sum kernel with all sizes baked in as Python constants."""
    ragged = (rows_total % row_tile) != 0  # trace-time decision

    def kernel(o_ref, l_ref, out_ref, acc_ref):
        step = pl.program_id(0)

        @pl.when(step == 0)
        def _():
            acc_ref[...] = jnp.zeros_like(acc_ref)

        # Cast inside the kernel so low-precision inputs stream at native width.
        diff = o_ref[...].astype(jnp.float32) - l_ref[...].astype(jnp.float32)
        absd = jnp.abs(diff)

        if ragged:
            # Last grid block extends past the real rows; mask those rows out.
            row_idx = (jax.lax.broadcasted_iota(jnp.int32, absd.shape, 0)
                       + step * row_tile)
            absd = jnp.where(row_idx < rows_total, absd, 0.0)

        # Pure elementwise VPU accumulation — no per-step cross-lane reduce,
        # no per-step (1,1) masked store.
        acc_ref[...] += absd

        @pl.when(step == n_tiles - 1)
        def _():
            # Single cross-lane/sublane reduce + mean divide, exactly once.
            out_ref[...] = (jnp.sum(acc_ref[...], keepdims=True) * inv_n
                            ).astype(out_ref.dtype)

    return kernel


def l1_loss(output, label):
    """Equivalent of nn.L1Loss()(output, label) -> scalar mean |output - label|."""
    assert output.shape == label.shape
    n_elems = output.size

    # Flatten in the ORIGINAL dtype (no wrapper upcast).
    flat_o = output.reshape(-1)
    flat_l = label.reshape(-1)

    # Only pad when N is not a multiple of 128 (not the case for 2*4*16*16).
    # Padded positions contribute |0 - 0| = 0 to the sum.
    lane_pad = (-n_elems) % LANES
    if lane_pad:
        flat_o = jnp.pad(flat_o, (0, lane_pad))
        flat_l = jnp.pad(flat_l, (0, lane_pad))

    rows = (n_elems + lane_pad) // LANES
    o2d = flat_o.reshape(rows, LANES)
    l2d = flat_l.reshape(rows, LANES)

    # Tile choice: whole slab in one grid step when it fits, else 1024-row
    # tiles (double-buffered footprint ~2 MiB -> safe on v5e/v6e/v7x).
    if rows <= MAX_ROW_TILE:
        row_tile = rows
        n_tiles = 1
    else:
        row_tile = MAX_ROW_TILE
        n_tiles = pl.cdiv(rows, row_tile)

    inv_n = 1.0 / float(n_elems)
    kernel = _make_l1_kernel(rows, row_tile, n_tiles, inv_n)

    # TODO(synk): for multi-MB inputs on v7x, a leading 2-wide "parallel" grid
    # axis with per-core partial sums would engage both TensorCores.
    result = pl.pallas_call(
        kernel,
        out_shape=jax.ShapeDtypeStruct((1, 1), jnp.float32),
        grid=(n_tiles,),
        in_specs=[
            pl.BlockSpec((row_tile, LANES), lambda i: (i, 0)),
            pl.BlockSpec((row_tile, LANES), lambda i: (i, 0)),
        ],
        out_specs=pl.BlockSpec((1, 1), lambda i: (0, 0)),
        scratch_shapes=[pltpu.VMEM((row_tile, LANES), jnp.float32)],
        compiler_params=pltpu.CompilerParams(
            dimension_semantics=("arbitrary",)  # reduction axis
        ),
    )(o2d, l2d)

    return result[0, 0]


if __name__ == "__main__":
    key = jax.random.PRNGKey(0)
    k1, k2 = jax.random.split(key)
    # Small shapes consistent with a conv-style output: N=2, C=4, H=W=16
    output = jax.random.normal(k1, (2, 4, 16, 16), dtype=jnp.float32)
    label = jax.random.normal(k2, (2, 4, 16, 16), dtype=jnp.float32)

    loss = l1_loss(output, label)
    jax.block_until_ready(loss)

    # sanity check against pure-JAX reference (same semantics as nn.L1Loss)
    ref = jnp.mean(jnp.abs(output - label))
    assert jnp.allclose(loss, ref, rtol=1e-5, atol=1e-6), (loss, ref)

    print("KERNEL_OK")
</pallas_src>

<mosaic_0001>
module attributes {stable_mosaic.version = 11 : i64} {
  func.func @kernel(%arg0: i32, %arg1: memref<16x128xf32, #tpu.memory_space<vmem>>, %arg2: memref<16x128xf32, #tpu.memory_space<vmem>>, %arg3: memref<1x1xf32, #tpu.memory_space<vmem>>, %arg4: memref<16x128xf32, #tpu.memory_space<vmem>>) attributes {dimension_semantics = [#tpu.dimension_semantics<arbitrary>], iteration_bounds = array<i64: 1>, scalar_prefetch = 0 : i64, scratch_operands = 1 : i64, tpu.core_type = #tpu.core_type<tc>, window_params = [{transform_indices = @transform_0, window_bounds = array<i64: 16, 128>}, {transform_indices = @transform_1, window_bounds = array<i64: 16, 128>}, {pipeline_mode = #tpu.pipeline_mode<synchronous>, transform_indices = @transform_2, window_bounds = array<i64: 1, 1>}]} {
    %c0_i32 = arith.constant 0 : i32
    %0 = arith.cmpi eq, %arg0, %c0_i32 : i32
    %1 = arith.extui %0 : i1 to i32
    %c0_i32_0 = arith.constant 0 : i32
    %2 = arith.cmpi ne, %1, %c0_i32_0 : i32
    scf.if %2 {
      %cst = arith.constant 0.000000e+00 : f32
      %13 = vector.broadcast %cst : f32 to vector<16x128xf32>
      %c0_10 = arith.constant 0 : index
      %c0_11 = arith.constant 0 : index
      %14 = vector.load %arg4[%c0_10, %c0_11] : memref<16x128xf32, #tpu.memory_space<vmem>>, vector<16x128xf32>
      tpu.vector_store %arg4[%c0_10, %c0_11], %13 {strides = array<i32>} : memref<16x128xf32, #tpu.memory_space<vmem>>, vector<16x128xf32>,
    } else {
    }
    %c0 = arith.constant 0 : index
    %c0_1 = arith.constant 0 : index
    %3 = vector.load %arg1[%c0, %c0_1] : memref<16x128xf32, #tpu.memory_space<vmem>>, vector<16x128xf32>
    %c0_2 = arith.constant 0 : index
    %c0_3 = arith.constant 0 : index
    %4 = vector.load %arg2[%c0_2, %c0_3] : memref<16x128xf32, #tpu.memory_space<vmem>>, vector<16x128xf32>
    %5 = arith.subf %3, %4 : vector<16x128xf32>
    %6 = math.absf %5 : vector<16x128xf32>
    %c0_4 = arith.constant 0 : index
    %c0_5 = arith.constant 0 : index
    %7 = vector.load %arg4[%c0_4, %c0_5] : memref<16x128xf32, #tpu.memory_space<vmem>>, vector<16x128xf32>
    %8 = arith.addf %7, %6 : vector<16x128xf32>
    %c0_6 = arith.constant 0 : index
    %c0_7 = arith.constant 0 : index
    %9 = vector.load %arg4[%c0_6, %c0_7] : memref<16x128xf32, #tpu.memory_space<vmem>>, vector<16x128xf32>
    tpu.vector_store %arg4[%c0_6, %c0_7], %8 {strides = array<i32>} : memref<16x128xf32, #tpu.memory_space<vmem>>, vector<16x128xf32>,
    %c0_i32_8 = arith.constant 0 : i32
    %10 = arith.cmpi eq, %arg0, %c0_i32_8 : i32
    %11 = arith.extui %10 : i1 to i32
    %c0_i32_9 = arith.constant 0 : i32
    %12 = arith.cmpi ne, %11, %c0_i32_9 : i32
    scf.if %12 {
      %c0_10 = arith.constant 0 : index
      %c0_11 = arith.constant 0 : index
      %13 = vector.load %arg4[%c0_10, %c0_11] : memref<16x128xf32, #tpu.memory_space<vmem>>, vector<16x128xf32>
      %14 = vector.shape_cast %13 : vector<16x128xf32> to vector<1x16x128xf32>
      %cst = arith.constant dense<0.000000e+00> : vector<1xf32>
      %15 = vector.multi_reduction <add>, %14, %cst [1, 2] : vector<1x16x128xf32> to vector<1xf32>
      %16 = vector.shape_cast %15 : vector<1xf32> to vector<1x1x1xf32>
      %17 = vector.extract %16[0, 0, 0] : f32 from vector<1x1x1xf32>
      %18 = vector.broadcast %17 : f32 to vector<1x1xf32>
      %cst_12 = arith.constant 4.8828125E-4 : f32
      %19 = vector.broadcast %cst_12 : f32 to vector<1x1xf32>
      %20 = arith.mulf %18, %19 : vector<1x1xf32>
      %c0_13 = arith.constant 0 : index
      %c0_14 = arith.constant 0 : index
      %21 = vector.load %arg3[%c0_13, %c0_14] : memref<1x1xf32, #tpu.memory_space<vmem>>, vector<1x1xf32>
      tpu.vector_store %arg3[%c0_13, %c0_14], %20 {strides = array<i32>} : memref<1x1xf32, #tpu.memory_space<vmem>>, vector<1x1xf32>,
    } else {
    }
    return
  }
  func.func @transform_0(%arg0: i32) -> (i32, i32) {
    %c0_i32 = arith.constant 0 : i32
    %c0_i32_0 = arith.constant 0 : i32
    return %arg0, %c0_i32 : i32, i32
  }
  func.func @transform_1(%arg0: i32) -> (i32, i32) {
    %c0_i32 = arith.constant 0 : i32
    %c0_i32_0 = arith.constant 0 : i32
    return %arg0, %c0_i32 : i32, i32
  }
  func.func @transform_2(%arg0: i32) -> (i32, i32) {
    %c0_i32 = arith.constant 0 : i32
    %c0_i32_0 = arith.constant 0 : i32
    %c0_i32_1 = arith.constant 0 : i32
    return %c0_i32, %c0_i32_0 : i32, i32
  }
}

</mosaic_0001>

<llo_original>
// kernel: tpu_custom_call.1
$region0: #{tpu_custom_call.1}
  #allocation0 [shape = 'u32[]', space=smem, size = 0x4, offset = 0x4, fixed_abs, tag = 'smem constant byte address 0x4 - core index']
  #allocation1 [shape = 'u32[144,128]{1,0:T(1,128)}', space=vmem, size = 0x12000, scoped, tag = 'internal scratch']
  #allocation2 [shape = 'f32[16,128]{1,0:T(8,128)}', space=vmem, size = 0x2000, scoped, tag = 'scratch operand']
  %s0 = inlined_call_operand.hbm [shape: f32[16,128], index: 0, kind: input, shape index: {}]
  %s1 = inlined_call_operand.hbm [shape: f32[16,128], index: 1, kind: input, shape index: {}]
  %s2 = inlined_call_operand.hbm [shape: f32[1,1], index: 2, kind: output, shape index: {}]
  %s3 = sld [smem:[#allocation0]]
  $region34: #{tpu_custom_call.1} parent=0
    _
  %s5 = ssub.s32 1, %s3
  %s6 = scalar_select 0, %s5, %s3
  $region1: #{tpu_custom_call.1} parent=0
    #allocation3 [shape = 'u8[8192]{0}', space=vmem, size = 0x2000, scoped, tag = 'input window, operand 0, single buffered']
    #allocation4 [shape = 's32[1]{0}', space=sflag, size = 0x4, scoped, tag = 'scoped memory for tpu_custom_call.1']
    #allocation5 [shape = 's32[1]{0}', space=sflag, size = 0x4, scoped, tag = 'scoped memory for tpu_custom_call.1']
    #allocation6 [shape = 'u8[8192]{0}', space=vmem, size = 0x2000, scoped, tag = 'input window, operand 1, single buffered']
    #allocation7 [shape = 's32[1]{0}', space=sflag, size = 0x4, scoped, tag = 'scoped memory for tpu_custom_call.1']
    #allocation8 [shape = 'u8[512]{0}', space=vmem, size = 0x400, scoped, tag = 'output window, operand 0, single buffered']
    %7 = vsyncpa [#allocation4], 0
    %8 = vsyncpa [#allocation7], 0
    %9 = vsyncpa [#allocation5], 0
    // Predicated region
    $region2: #{tpu_custom_call.1} parent=1 // pred_check
      _
    $region3: #{tpu_custom_call.1} parent=1 // pred_check_branch
      %11 = sbr.rel (0) target = $region5
    $region4: #{tpu_custom_call.1} parent=1 // pred_region
      %s13 = ssub.s32 256, 256
      %14 = vsyncadd [#allocation4], %s13
      %s15 = sshll.u32 [#allocation3], 4
      %s16 = int_to_ptr.vmem [resolvable:$true] %s15
      %21 = dma.hbm_to_vmem [thread:$0]  %s0, 256, %s16, [#allocation4], 128, 128, 8
    $region5: #{tpu_custom_call.1} parent=1 // pred_fallthru
      _
    // Predicated region
    $region6: #{tpu_custom_call.1} parent=1 // pred_check
      _
    $region7: #{tpu_custom_call.1} parent=1 // pred_check_branch
      %23 = sbr.rel (0) target = $region9
    $region8: #{tpu_custom_call.1} parent=1 // pred_region
      %s25 = ssub.s32 256, 256
      %26 = vsyncadd [#allocation7], %s25
      %s27 = sshll.u32 [#allocation6], 4
      %s28 = int_to_ptr.vmem [resolvable:$true] %s27
      %33 = dma.hbm_to_vmem [thread:$0]  %s1, 256, %s28, [#allocation7], 128, 128, 8
    $region9: #{tpu_custom_call.1} parent=1 // pred_fallthru
      _
    // Predicated region
    $region10: #{tpu_custom_call.1} parent=1 // pred_check
      _
    $region11: #{tpu_custom_call.1} parent=1 // pred_check_branch
      %35 = sbr.rel (0) target = $region13
    $region12: #{tpu_custom_call.1} parent=1 // pred_region
      %36 = dma.done [#allocation4], 256
    $region13: #{tpu_custom_call.1} parent=1 // pred_fallthru
      _
    // Predicated region
    $region14: #{tpu_custom_call.1} parent=1 // pred_check
      _
    $region15: #{tpu_custom_call.1} parent=1 // pred_check_branch
      %38 = sbr.rel (0) target = $region17
    $region16: #{tpu_custom_call.1} parent=1 // pred_region
      %39 = dma.done [#allocation7], 256
    $region17: #{tpu_custom_call.1} parent=1 // pred_fallthru
      _
    %p40 = scmp.eq.s32.totalorder 0, 0
    // Predicated region
    $region18: #{tpu_custom_call.1} parent=1 // pred_check
      %p41 = pneg %p40
    $region19: #{tpu_custom_call.1} parent=1 // pred_check_branch
      %43 = sbr.rel (%p41) target = $region21
    $region20: #{tpu_custom_call.1} parent=1 // pred_region
      %44 = vst [vmem:[#allocation2] sm:$0xff] 0.0
      %45 = vst [vmem:[#allocation2 + $0x8] sm:$0xff] 0.0
    $region21: #{tpu_custom_call.1} parent=1 // pred_fallthru
      _
    %v46 = vld [vmem:[#allocation3] sm:$0xff]
    %v47 = vld [vmem:[#allocation3 + $0x8] sm:$0xff]
    %v48 = vld [vmem:[#allocation6] sm:$0xff]
    %v49 = vld [vmem:[#allocation6 + $0x8] sm:$0xff]
    %v50 = vsub.f32 %v46, %v48
    %v51 = vsub.f32 %v47, %v49
    %v52 = vand.u32 2147483647, %v50
    %v53 = vand.u32 2147483647, %v51
    %v54 = vld [vmem:[#allocation2] sm:$0xff]
    %v55 = vld [vmem:[#allocation2 + $0x8] sm:$0xff]
    %v56 = vadd.f32 %v54, %v52
    %v57 = vadd.f32 %v55, %v53
    %58 = vst [vmem:[#allocation2] sm:$0xff] %v56
    %59 = vst [vmem:[#allocation2 + $0x8] sm:$0xff] %v57
    // Predicated region
    $region22: #{tpu_custom_call.1} parent=1 // pred_check
      %p60 = pneg %p40
    $region23: #{tpu_custom_call.1} parent=1 // pred_check_branch
      %62 = sbr.rel (%p60) target = $region25
    $region24: #{tpu_custom_call.1} parent=1 // pred_region
      %v63 = vld [vmem:[#allocation2] sm:$0xff]
      %v64 = vld [vmem:[#allocation2 + $0x8] sm:$0xff]
      %v65 = vadd.f32 %v63, %v64
      %66 = vadd.xlane.f32.xlu0 %v65
      %v67 = vpop.xlane.xlu0 %66
      %v68 = vrot.slane %v67, 4
      %v69 = vadd.f32 %v67, %v68
      %v70 = vrot.slane %v69, 2
      %v71 = vadd.f32 %v69, %v70
      %v72 = vrot.slane %v71, 1
      %v73 = vadd.f32 %v71, %v72
      %s74 = vtos %v73
      %v75 = vstv %s74
      %v76 = vmul.f32 %v75, 0.00048828125
      %vm77 = vcmask 0
      %78 = vst.msk [vmem:[#allocation8] sm:$0x1] %vm77, %v76
    $region25: #{tpu_custom_call.1} parent=1 // pred_fallthru
      _
    // Predicated region
    $region26: #{tpu_custom_call.1} parent=1 // pred_check
      _
    $region27: #{tpu_custom_call.1} parent=1 // pred_check_branch
      %80 = sbr.rel (0) target = $region29
    $region28: #{tpu_custom_call.1} parent=1 // pred_region
      %s82 = ssub.s32 16, 16
      %83 = vsyncadd [#allocation5], %s82
      %s85 = sshll.u32 [#allocation8], 4
      %s86 = int_to_ptr.vmem [resolvable:$true] %s85
      %88 = dma.vmem_to_hbm [thread:$0]  %s86, 16, %s2, [#allocation5]
    $region29: #{tpu_custom_call.1} parent=1 // pred_fallthru
      _
    // Predicated region
    $region30: #{tpu_custom_call.1} parent=1 // pred_check
      _
    $region31: #{tpu_custom_call.1} parent=1 // pred_check_branch
      %90 = sbr.rel (0) target = $region33
    $region32: #{tpu_custom_call.1} parent=1 // pred_region
      %91 = dma.done [#allocation5], 16
    $region33: #{tpu_custom_call.1} parent=1 // pred_fallthru
      _
    %92 = vsyncpa [#allocation4], 1
    %93 = vsyncpa [#allocation7], 1
    %94 = vsyncpa [#allocation5], 1

</llo_original>
